<compile_context>
chip_gen: v7x
topology: tpu7x:2x2x1
jax: 0.10.0
libtpu: 0.0.40
codegen_flags: <defaults>
</compile_context>

<pallas_src>
import functools

import jax
import jax.numpy as jnp
from jax.experimental import pallas as pl
from jax.experimental.pallas import tpu as pltpu


def _round_up(x, m):
    return (x + m - 1) // m * m


# ----------------------------------------------------------------------------
# Pass 1: fused im2col matmul on the MXU for one row tile (bf16 operands, f32
# accumulation), plus per-tile partial BatchNorm statistics:
#   sum over valid rows, and centered sum-of-squares around the tile mean
#   (padded rows masked out) -> merged with a Chan/Welford combine in JAX.
# ----------------------------------------------------------------------------
def _conv_stats_kernel(a_ref, w_ref, y_ref, sum_ref, m2_ref, *,
                       total_rows, tile_rows):
    acc = jnp.dot(a_ref[...], w_ref[...], preferred_element_type=jnp.float32)
    y_ref[...] = acc.astype(y_ref.dtype)          # bf16 intermediate to HBM

    base = pl.program_id(0) * tile_rows
    n_valid = jnp.maximum(
        jnp.minimum(total_rows - base, tile_rows), 1).astype(jnp.float32)

    col_sum = jnp.sum(acc, axis=0, keepdims=True)       # padded rows are 0
    tile_mean = col_sum / n_valid
    row_ids = jax.lax.broadcasted_iota(jnp.int32, acc.shape, 0)
    valid = (row_ids + base) < total_rows
    d = jnp.where(valid, acc - tile_mean, 0.0)
    m2 = jnp.sum(d * d, axis=0, keepdims=True)

    sum_ref[...] = col_sum.reshape(sum_ref.shape)
    m2_ref[...] = m2.reshape(m2_ref.shape)


# ----------------------------------------------------------------------------
# Pass 2: apply BatchNorm affine (precomputed per-channel scale/shift, f32 math)
# and the optional ReLU.  Reads bf16, writes bf16 in place (aliased).
# ----------------------------------------------------------------------------
def _bn_act_kernel(y_ref, scale_ref, shift_ref, o_ref, *, last):
    y = y_ref[...].astype(jnp.float32) * scale_ref[...] + shift_ref[...]
    if not last:
        y = jnp.maximum(y, 0.0)
    o_ref[...] = y.astype(o_ref.dtype)


# ----------------------------------------------------------------------------
# Wrapper: layout conversion, transposed-conv -> "full" conv rewrite
# (dilate / pad / flip), im2col packing (bf16), two pallas_calls, unpad.
# ----------------------------------------------------------------------------
def inverse_block_forward(x_nchw, weight, gamma, beta, *, stride=1,
                          output_padding=0, last=False, eps=1e-5,
                          tile_rows=1024):
    """x_nchw: (N, C_in, H, W).  weight: (C_in, C_out, K, K) (torch layout)."""
    N, C_in, H, W = x_nchw.shape
    _, C_out, K, _ = weight.shape

    # --- NCHW -> NHWC (bf16), dilate by stride, zero-pad (K-1)+output_padding -
    x = jnp.transpose(x_nchw, (0, 2, 3, 1)).astype(jnp.bfloat16)
    Hd = (H - 1) * stride + 1
    Wd = (W - 1) * stride + 1
    if stride > 1:
        x_dil = jnp.zeros((N, Hd, Wd, C_in), jnp.bfloat16)
        x_dil = x_dil.at[:, ::stride, ::stride, :].set(x)
    else:
        x_dil = x
    pad_lo, pad_hi = K - 1, K - 1 + output_padding
    x_pad = jnp.pad(x_dil, ((0, 0), (pad_lo, pad_hi), (pad_lo, pad_hi), (0, 0)))

    Ho = (H - 1) * stride + K + output_padding
    Wo = (W - 1) * stride + K + output_padding

    # --- im2col in bf16: (N*Ho*Wo, K*K*C_in) ---------------------------------
    cols = [x_pad[:, kh:kh + Ho, kw:kw + Wo, :]
            for kh in range(K) for kw in range(K)]
    patches = jnp.concatenate(cols, axis=-1).reshape(N * Ho * Wo, K * K * C_in)

    R = N * Ho * Wo
    CK = K * K * C_in
    CKp = _round_up(CK, 8)              # NO 128-pad: full-extent block instead
    COp = _round_up(C_out, 128)         # output channels -> lane-dense stores

    # --- row-tile sizing ------------------------------------------------------
    TM = max(128, _round_up(min(tile_rows, 4096), 128))
    # v7x: keep >= 4 grid steps so both TensorCores stay busy on small problems.
    while TM > 128 and pl.cdiv(R, TM) < 4:
        TM //= 2
    # VMEM guard (re-derived for v7x's 64 MiB): keep double-buffered A+Y tiles
    # well under the scoped limit; shrink TM instead of adding a CK grid axis.
    while TM > 128 and 2 * TM * (CKp + COp) * 2 > 16 * 1024 * 1024:
        TM //= 2
    Rp = _round_up(R, TM)
    num_tiles = Rp // TM

    a_mat = jnp.pad(patches, ((0, Rp - R), (0, CKp - CK)))     # bf16

    # Flipped, re-laid-out weight: w_mat[(kh*K+kw)*C_in + c, o] = w[c,o,K-1-kh,K-1-kw]
    w_flip = weight[:, :, ::-1, ::-1].astype(jnp.float32)
    w_mat = jnp.transpose(w_flip, (2, 3, 0, 1)).reshape(CK, C_out)
    w_mat = jnp.pad(w_mat, ((0, CKp - CK), (0, COp - C_out))).astype(jnp.bfloat16)

    cparams = pltpu.CompilerParams(
        dimension_semantics=("parallel",),
        vmem_limit_bytes=32 * 1024 * 1024,   # safe on v5e/v6e (128 MiB) and v7x (64 MiB)
    )

    # --- pass 1: conv tiles (bf16 out) + per-tile partial stats ---------------
    conv_out, sum_out, m2_out = pl.pallas_call(
        functools.partial(_conv_stats_kernel, total_rows=R, tile_rows=TM),
        out_shape=(
            jax.ShapeDtypeStruct((Rp, COp), jnp.bfloat16),
            jax.ShapeDtypeStruct((num_tiles, 1, COp), jnp.float32),
            jax.ShapeDtypeStruct((num_tiles, 1, COp), jnp.float32),
        ),
        grid_spec=pltpu.PrefetchScalarGridSpec(
            num_scalar_prefetch=0,
            grid=(num_tiles,),
            in_specs=[
                pl.BlockSpec((TM, CKp), lambda i: (i, 0)),
                pl.BlockSpec((CKp, COp), lambda i: (0, 0)),
            ],
            out_specs=(
                pl.BlockSpec((TM, COp), lambda i: (i, 0)),
                pl.BlockSpec((1, 1, COp), lambda i: (i, 0, 0)),
                pl.BlockSpec((1, 1, COp), lambda i: (i, 0, 0)),
            ),
        ),
        compiler_params=cparams,
    )(a_mat, w_mat)

    # --- tiny cross-tile reduction: Chan/Welford merge of per-tile partials ---
    n_t = jnp.clip(R - jnp.arange(num_tiles) * TM, 0, TM).astype(jnp.float32)
    sums = sum_out[:, 0, :]                       # (num_tiles, COp)
    m2s = m2_out[:, 0, :]
    mean = jnp.sum(sums, axis=0) / float(R)
    mean_t = sums / n_t[:, None]
    m2_total = jnp.sum(m2s + n_t[:, None] * (mean_t - mean[None, :]) ** 2, axis=0)
    var = m2_total / float(R)                     # biased variance (BN batch stats)

    gamma_p = jnp.pad(gamma.astype(jnp.float32), (0, COp - C_out))
    beta_p = jnp.pad(beta.astype(jnp.float32), (0, COp - C_out))
    inv_std = jax.lax.rsqrt(var + eps)
    scale = (gamma_p * inv_std).reshape(1, COp)
    shift = (beta_p - mean * gamma_p * inv_std).reshape(1, COp)

    # --- pass 2: normalize + optional ReLU, written in place over conv_out ----
    y_flat = pl.pallas_call(
        functools.partial(_bn_act_kernel, last=last),
        out_shape=jax.ShapeDtypeStruct((Rp, COp), jnp.bfloat16),
        grid_spec=pltpu.PrefetchScalarGridSpec(
            num_scalar_prefetch=0,
            grid=(num_tiles,),
            in_specs=[
                pl.BlockSpec((TM, COp), lambda i: (i, 0)),
                pl.BlockSpec((1, COp), lambda i: (0, 0)),
                pl.BlockSpec((1, COp), lambda i: (0, 0)),
            ],
            out_specs=pl.BlockSpec((TM, COp), lambda i: (i, 0)),
        ),
        compiler_params=cparams,
        input_output_aliases={0: 0},              # reuse conv_out's HBM buffer
    )(conv_out, scale, shift)

    # --- unpad + NHWC -> NCHW (f32 cast folded into this pass); callers that
    #     accept NHWC could skip the transpose entirely. ------------------------
    y = y_flat[:R, :C_out].astype(jnp.float32).reshape(N, Ho, Wo, C_out)
    return jnp.transpose(y, (0, 3, 1, 2))


# ----------------------------------------------------------------------------
# Pure-JAX reference (independent path via lax.conv_general_dilated) for a
# correctness sanity check against the PyTorch semantics.
# ----------------------------------------------------------------------------
def _reference_forward(x_nchw, weight, gamma, beta, *, stride, output_padding,
                       last, eps):
    K = weight.shape[-1]
    w = jnp.transpose(weight, (1, 0, 2, 3))[:, :, ::-1, ::-1]   # (C_out,C_in,K,K)
    pad = ((K - 1, K - 1 + output_padding), (K - 1, K - 1 + output_padding))
    conv = jax.lax.conv_general_dilated(
        x_nchw.astype(jnp.float32), w.astype(jnp.float32),
        window_strides=(1, 1), padding=pad,
        lhs_dilation=(stride, stride),
        dimension_numbers=("NCHW", "OIHW", "NCHW"),
        precision=jax.lax.Precision.HIGHEST)
    mean = conv.mean(axis=(0, 2, 3), keepdims=True)
    var = jnp.mean((conv - mean) ** 2, axis=(0, 2, 3), keepdims=True)
    y = (conv - mean) * (gamma.reshape(1, -1, 1, 1) * jax.lax.rsqrt(var + eps))
    y = y + beta.reshape(1, -1, 1, 1)
    if not last:
        y = jnp.maximum(y, 0.0)
    return y


# ----------------------------------------------------------------------------
# Deterministic parameter init (matches module __init__):
#   conv.weight : (in_planes, out_planes, 3, 3)  xavier_uniform
#   bn.weight   : ones(out_planes), bn.bias : zeros(out_planes)
# ----------------------------------------------------------------------------
def init_inverse_block_params(key, in_planes, out_planes, K=3):
    fan_in = out_planes * K * K    # torch: size(1) * receptive_field
    fan_out = in_planes * K * K    # torch: size(0) * receptive_field
    a = (6.0 / (fan_in + fan_out)) ** 0.5
    weight = jax.random.uniform(key, (in_planes, out_planes, K, K),
                                jnp.float32, minval=-a, maxval=a)
    gamma = jnp.ones((out_planes,), jnp.float32)
    beta = jnp.zeros((out_planes,), jnp.float32)
    return weight, gamma, beta


if __name__ == "__main__":
    key = jax.random.PRNGKey(0)
    k_x, k_w = jax.random.split(key)

    N, in_planes, out_planes, H, W = 2, 4, 8, 16, 16
    stride, output_padding, last = 1, 0, False

    x = jax.random.normal(k_x, (N, in_planes, H, W), jnp.float32)
    weight, gamma, beta = init_inverse_block_params(k_w, in_planes, out_planes)

    fwd = jax.jit(functools.partial(inverse_block_forward, stride=stride,
                                    output_padding=output_padding, last=last))
    out = fwd(x, weight, gamma, beta)
    out = jax.block_until_ready(out)

    ref = _reference_forward(x, weight, gamma, beta, stride=stride,
                             output_padding=output_padding, last=last, eps=1e-5)

    # TODO(synk): BatchNorm running_mean/running_var buffer updates (a training
    # side effect of the torch module) are not modeled; output uses batch stats.
    assert out.shape == (N, out_planes, H + 2, W + 2), out.shape
    # bf16 MXU operands / bf16 intermediate -> loosened tolerance vs f32 reference.
    assert jnp.allclose(out, ref, rtol=5e-2, atol=5e-2), "mismatch vs reference"

    print("KERNEL_OK")
</pallas_src>

<mosaic_0001>
module attributes {stable_mosaic.version = 11 : i64} {
  func.func @_conv_stats_kernel(%arg0: i32, %arg1: memref<128x40xbf16, #tpu.memory_space<vmem>>, %arg2: memref<40x128xbf16, #tpu.memory_space<vmem>>, %arg3: memref<128x128xbf16, #tpu.memory_space<vmem>>, %arg4: memref<1x1x128xf32, #tpu.memory_space<vmem>>, %arg5: memref<1x1x128xf32, #tpu.memory_space<vmem>>) attributes {dimension_semantics = [#tpu.dimension_semantics<parallel>], iteration_bounds = array<i64: 6>, scalar_prefetch = 0 : i64, scratch_operands = 0 : i64, tpu.core_type = #tpu.core_type<tc>, window_params = [{transform_indices = @transform_0, window_bounds = array<i64: 128, 40>}, {pipeline_mode = #tpu.pipeline_mode<synchronous>, transform_indices = @transform_1, window_bounds = array<i64: 40, 128>}, {transform_indices = @transform_2, window_bounds = array<i64: 128, 128>}, {transform_indices = @transform_3, window_bounds = array<i64: 1, 1, 128>}, {transform_indices = @transform_4, window_bounds = array<i64: 1, 1, 128>}]} {
    %c0 = arith.constant 0 : index
    %c0_0 = arith.constant 0 : index
    %0 = vector.load %arg1[%c0, %c0_0] : memref<128x40xbf16, #tpu.memory_space<vmem>>, vector<128x40xbf16>
    %c0_1 = arith.constant 0 : index
    %c0_2 = arith.constant 0 : index
    %1 = vector.load %arg2[%c0_1, %c0_2] : memref<40x128xbf16, #tpu.memory_space<vmem>>, vector<40x128xbf16>
    %cst = arith.constant dense<0.000000e+00> : vector<128x128xf32>
    %2 = tpu.matmul %0, %1, %cst {dimension_numbers = #tpu.dot_dimension_numbers<[1], [0], [0], [1], [0, 0, 1, 1], [], []>} : vector<128x40xbf16>, vector<40x128xbf16>, vector<128x128xf32> -> vector<128x128xf32>
    %3 = arith.truncf %2 : vector<128x128xf32> to vector<128x128xbf16>
    %c0_3 = arith.constant 0 : index
    %c0_4 = arith.constant 0 : index
    %4 = vector.load %arg3[%c0_3, %c0_4] : memref<128x128xbf16, #tpu.memory_space<vmem>>, vector<128x128xbf16>
    tpu.vector_store %arg3[%c0_3, %c0_4], %3 {strides = array<i32>} : memref<128x128xbf16, #tpu.memory_space<vmem>>, vector<128x128xbf16>,
    %c128_i32 = arith.constant 128 : i32
    %5 = arith.muli %arg0, %c128_i32 : i32
    %c648_i32 = arith.constant 648 : i32
    %6 = arith.subi %c648_i32, %5 : i32
    %c128_i32_5 = arith.constant 128 : i32
    %7 = arith.minsi %6, %c128_i32_5 : i32
    %c1_i32 = arith.constant 1 : i32
    %8 = arith.maxsi %7, %c1_i32 : i32
    %9 = arith.sitofp %8 : i32 to f32
    %cst_6 = arith.constant dense<0.000000e+00> : vector<128xf32>
    %10 = vector.multi_reduction <add>, %2, %cst_6 [0] : vector<128x128xf32> to vector<128xf32>
    %11 = vector.shape_cast %10 : vector<128xf32> to vector<1x128xf32>
    %12 = vector.broadcast %9 : f32 to vector<1x128xf32>
    %13 = arith.divf %11, %12 : vector<1x128xf32>
    %14 = tpu.iota {dimensions = array<i32: 0>} : vector<128x128xi32>
    %15 = vector.broadcast %5 : i32 to vector<128x128xi32>
    %16 = arith.addi %14, %15 : vector<128x128xi32>
    %c648_i32_7 = arith.constant 648 : i32
    %17 = vector.broadcast %c648_i32_7 : i32 to vector<128x128xi32>
    %18 = arith.cmpi slt, %16, %17 : vector<128x128xi32>
    %19 = vector.broadcast %13 : vector<1x128xf32> to vector<128x128xf32>
    %20 = arith.subf %2, %19 : vector<128x128xf32>
    %cst_8 = arith.constant 0.000000e+00 : f32
    %21 = vector.broadcast %cst_8 : f32 to vector<128x128xf32>
    %22 = arith.select %18, %20, %21 : vector<128x128xi1>, vector<128x128xf32>
    %23 = arith.mulf %22, %22 : vector<128x128xf32>
    %cst_9 = arith.constant dense<0.000000e+00> : vector<128xf32>
    %24 = vector.multi_reduction <add>, %23, %cst_9 [0] : vector<128x128xf32> to vector<128xf32>
    %25 = vector.shape_cast %24 : vector<128xf32> to vector<1x128xf32>
    %26 = vector.shape_cast %11 : vector<1x128xf32> to vector<1x1x128xf32>
    %c0_10 = arith.constant 0 : index
    %c0_11 = arith.constant 0 : index
    %c0_12 = arith.constant 0 : index
    %27 = vector.load %arg4[%c0_10, %c0_11, %c0_12] : memref<1x1x128xf32, #tpu.memory_space<vmem>>, vector<1x1x128xf32>
    tpu.vector_store %arg4[%c0_10, %c0_11, %c0_12], %26 {strides = array<i32>} : memref<1x1x128xf32, #tpu.memory_space<vmem>>, vector<1x1x128xf32>,
    %28 = vector.shape_cast %25 : vector<1x128xf32> to vector<1x1x128xf32>
    %c0_13 = arith.constant 0 : index
    %c0_14 = arith.constant 0 : index
    %c0_15 = arith.constant 0 : index
    %29 = vector.load %arg5[%c0_13, %c0_14, %c0_15] : memref<1x1x128xf32, #tpu.memory_space<vmem>>, vector<1x1x128xf32>
    tpu.vector_store %arg5[%c0_13, %c0_14, %c0_15], %28 {strides = array<i32>} : memref<1x1x128xf32, #tpu.memory_space<vmem>>, vector<1x1x128xf32>,
    return
  }
  func.func @transform_0(%arg0: i32) -> (i32, i32) {
    %c0_i32 = arith.constant 0 : i32
    %c0_i32_0 = arith.constant 0 : i32
    return %arg0, %c0_i32 : i32, i32
  }
  func.func @transform_1(%arg0: i32) -> (i32, i32) {
    %c0_i32 = arith.constant 0 : i32
    %c0_i32_0 = arith.constant 0 : i32
    %c0_i32_1 = arith.constant 0 : i32
    return %c0_i32, %c0_i32_0 : i32, i32
  }
  func.func @transform_2(%arg0: i32) -> (i32, i32) {
    %c0_i32 = arith.constant 0 : i32
    %c0_i32_0 = arith.constant 0 : i32
    return %arg0, %c0_i32 : i32, i32
  }
  func.func @transform_3(%arg0: i32) -> (i32, i32, i32) {
    %c0_i32 = arith.constant 0 : i32
    %c0_i32_0 = arith.constant 0 : i32
    %c0_i32_1 = arith.constant 0 : i32
    return %arg0, %c0_i32, %c0_i32_0 : i32, i32, i32
  }
  func.func @transform_4(%arg0: i32) -> (i32, i32, i32) {
    %c0_i32 = arith.constant 0 : i32
    %c0_i32_0 = arith.constant 0 : i32
    %c0_i32_1 = arith.constant 0 : i32
    return %arg0, %c0_i32, %c0_i32_0 : i32, i32, i32
  }
}

module attributes {stable_mosaic.version = 11 : i64} {
  func.func @_bn_act_kernel(%arg0: i32, %arg1: memref<128x128xbf16, #tpu.memory_space<vmem>>, %arg2: memref<1x128xf32, #tpu.memory_space<vmem>>, %arg3: memref<1x128xf32, #tpu.memory_space<vmem>>, %arg4: memref<128x128xbf16, #tpu.memory_space<vmem>>) attributes {dimension_semantics = [#tpu.dimension_semantics<parallel>], iteration_bounds = array<i64: 6>, scalar_prefetch = 0 : i64, scratch_operands = 0 : i64, tpu.core_type = #tpu.core_type<tc>, window_params = [{transform_indices = @transform_0, window_bounds = array<i64: 128, 128>}, {pipeline_mode = #tpu.pipeline_mode<synchronous>, transform_indices = @transform_1, window_bounds = array<i64: 1, 128>}, {pipeline_mode = #tpu.pipeline_mode<synchronous>, transform_indices = @transform_2, window_bounds = array<i64: 1, 128>}, {transform_indices = @transform_3, window_bounds = array<i64: 128, 128>}]} {
    %c0 = arith.constant 0 : index
    %c0_0 = arith.constant 0 : index
    %0 = vector.load %arg1[%c0, %c0_0] : memref<128x128xbf16, #tpu.memory_space<vmem>>, vector<128x128xbf16>
    %1 = arith.extf %0 : vector<128x128xbf16> to vector<128x128xf32>
    %c0_1 = arith.constant 0 : index
    %c0_2 = arith.constant 0 : index
    %2 = vector.load %arg2[%c0_1, %c0_2] : memref<1x128xf32, #tpu.memory_space<vmem>>, vector<1x128xf32>
    %3 = vector.broadcast %2 : vector<1x128xf32> to vector<128x128xf32>
    %4 = arith.mulf %1, %3 : vector<128x128xf32>
    %c0_3 = arith.constant 0 : index
    %c0_4 = arith.constant 0 : index
    %5 = vector.load %arg3[%c0_3, %c0_4] : memref<1x128xf32, #tpu.memory_space<vmem>>, vector<1x128xf32>
    %6 = vector.broadcast %5 : vector<1x128xf32> to vector<128x128xf32>
    %7 = arith.addf %4, %6 : vector<128x128xf32>
    %cst = arith.constant 0.000000e+00 : f32
    %8 = vector.broadcast %cst : f32 to vector<128x128xf32>
    %9 = arith.maximumf %7, %8 : vector<128x128xf32>
    %10 = arith.truncf %9 : vector<128x128xf32> to vector<128x128xbf16>
    %c0_5 = arith.constant 0 : index
    %c0_6 = arith.constant 0 : index
    %11 = vector.load %arg4[%c0_5, %c0_6] : memref<128x128xbf16, #tpu.memory_space<vmem>>, vector<128x128xbf16>
    tpu.vector_store %arg4[%c0_5, %c0_6], %10 {strides = array<i32>} : memref<128x128xbf16, #tpu.memory_space<vmem>>, vector<128x128xbf16>,
    return
  }
  func.func @transform_0(%arg0: i32) -> (i32, i32) {
    %c0_i32 = arith.constant 0 : i32
    %c0_i32_0 = arith.constant 0 : i32
    return %arg0, %c0_i32 : i32, i32
  }
  func.func @transform_1(%arg0: i32) -> (i32, i32) {
    %c0_i32 = arith.constant 0 : i32
    %c0_i32_0 = arith.constant 0 : i32
    %c0_i32_1 = arith.constant 0 : i32
    return %c0_i32, %c0_i32_0 : i32, i32
  }
  func.func @transform_2(%arg0: i32) -> (i32, i32) {
    %c0_i32 = arith.constant 0 : i32
    %c0_i32_0 = arith.constant 0 : i32
    %c0_i32_1 = arith.constant 0 : i32
    return %c0_i32, %c0_i32_0 : i32, i32
  }
  func.func @transform_3(%arg0: i32) -> (i32, i32) {
    %c0_i32 = arith.constant 0 : i32
    %c0_i32_0 = arith.constant 0 : i32
    return %arg0, %c0_i32 : i32, i32
  }
}

</mosaic_0001>

<llo_original>
// kernel: inverse_block_forward.3
$region0: #{inverse_block_forward.3}
  #allocation0 [shape = 'u32[]', space=smem, size = 0x4, offset = 0x4, fixed_abs, tag = 'smem constant byte address 0x4 - core index']
  #allocation1 [shape = 'u32[144,128]{1,0:T(1,128)}', space=vmem, size = 0x12000, scoped, tag = 'internal scratch']
  %s0 = inlined_call_operand.vmem [shape: bf16[768,128], index: 0, kind: input, shape index: {}, may-alias: {0,3}]
  %s1 = inlined_call_operand.vmem [shape: f32[1,128], index: 1, kind: input, shape index: {}]
  %s2 = inlined_call_operand.vmem [shape: f32[1,128], index: 2, kind: input, shape index: {}]
  %s3 = inlined_call_operand.vmem [shape: bf16[768,128], index: 3, kind: output, shape index: {}, may-alias: {0,3}]
  %s4 = sld [smem:[#allocation0]]
  $region45: #{inverse_block_forward.3} parent=0
    _
  %s6 = ssub.s32 1, %s4
  %s7 = scalar_select 0, %s6, %s4
  loop: start=0, step=1, limit=8
  $region2: #{inverse_block_forward.3} parent=0 // loop_pre_header
    _
  $region3: #{inverse_block_forward.3} parent=0 // loop_header
    %s9 = sphi 0, %s13
    %p10 = scmp.ge.s32.totalorder %s9, 8
    %s19 = sphi 0, %s21
    %s22 = sphi 0, %s19
    %s23 = sphi 0, %s22
    %s39 = sphi 0, %s23
    %s43 = sphi 0, %s43
    %s45 = sphi 0, %s43
    %s46 = sphi 0, %s45
    %s60 = sphi 0, %s46
    %s64 = sphi 0, %s64
    %s66 = sphi 0, %s64
    %s67 = sphi 0, %s66
    %s81 = sphi 0, %s67
    %s87 = sphi 0, %s89
    %s90 = sphi 0, %s87
    %s91 = sphi 0, %s90
    %s107 = sphi 0, %s91
  $region4: #{inverse_block_forward.3} parent=0 // loop_header_branch
    %12 = sbr.rel (%p10) target = $region8
  $region5: #{inverse_block_forward.3} parent=0 // loop_body
    %s14 = ssub.s32 %s9, 1
    %s15 = ssub.s32 %s9, 2
    %s16 = sadd.s32 %s9, 1
    %s17 = ssub.s32 %s9, %s16
    %p18 = scmp.eq.s32.totalorder %s17, 0
    %s20 = sadd.s32 %s19, 1
    %s21 = scalar_select %p18, %s19, %s20
    %p24 = pneg %p18
    %p25 = scmp.eq.s32.totalorder %s9, 5
    %p26 = por %p24, %p25
    %p27 = scmp.ne.s32.totalorder %s19, %s22
    %p28 = scmp.eq.s32.totalorder %s9, 0
    %p29 = por %p27, %p28
    %p30 = scmp.ne.s32.totalorder %s19, %s22
    %p31 = scmp.eq.s32.totalorder %s14, 5
    %p32 = por %p30, %p31
    %p33 = scmp.ne.s32.totalorder %s22, %s23
    %p34 = scmp.eq.s32.totalorder %s14, 0
    %p35 = por %p33, %p34
    %p36 = scmp.ne.s32.totalorder %s22, %s23
    %p37 = scmp.eq.s32.totalorder %s15, 5
    %p38 = por %p36, %p37
    %p40 = scmp.ne.s32.totalorder %s23, %s39
    %p41 = scmp.eq.s32.totalorder %s15, 0
    %p42 = por %p40, %p41
    %s44 = sadd.s32 %s43, 1
    %p47 = scmp.eq.s32.totalorder %s9, 5
    %p48 = scmp.ne.s32.totalorder %s43, %s45
    %p49 = scmp.eq.s32.totalorder %s9, 0
    %p50 = por %p48, %p49
    %p51 = scmp.ne.s32.totalorder %s43, %s45
    %p52 = scmp.eq.s32.totalorder %s14, 5
    %p53 = por %p51, %p52
    %p54 = scmp.ne.s32.totalorder %s45, %s46
    %p55 = scmp.eq.s32.totalorder %s14, 0
    %p56 = por %p54, %p55
    %p57 = scmp.ne.s32.totalorder %s45, %s46
    %p58 = scmp.eq.s32.totalorder %s15, 5
    %p59 = por %p57, %p58
    %p61 = scmp.ne.s32.totalorder %s46, %s60
    %p62 = scmp.eq.s32.totalorder %s15, 0
    %p63 = por %p61, %p62
    %s65 = sadd.s32 %s64, 1
    %p68 = scmp.eq.s32.totalorder %s9, 5
    %p69 = scmp.ne.s32.totalorder %s64, %s66
    %p70 = scmp.eq.s32.totalorder %s9, 0
    %p71 = por %p69, %p70
    %p72 = scmp.ne.s32.totalorder %s64, %s66
    %p73 = scmp.eq.s32.totalorder %s14, 5
    %p74 = por %p72, %p73
    %p75 = scmp.ne.s32.totalorder %s66, %s67
    %p76 = scmp.eq.s32.totalorder %s14, 0
    %p77 = por %p75, %p76
    %p78 = scmp.ne.s32.totalorder %s66, %s67
    %p79 = scmp.eq.s32.totalorder %s15, 5
    %p80 = por %p78, %p79
    %p82 = scmp.ne.s32.totalorder %s67, %s81
    %p83 = scmp.eq.s32.totalorder %s15, 0
    %p84 = por %p82, %p83
    %s85 = ssub.s32 %s9, %s16
    %p86 = scmp.eq.s32.totalorder %s85, 0
    %s88 = sadd.s32 %s87, 1
    %s89 = scalar_select %p86, %s87, %s88
    %p92 = pneg %p86
    %p93 = scmp.eq.s32.totalorder %s9, 5
    %p94 = por %p92, %p93
    %p95 = scmp.ne.s32.totalorder %s87, %s90
    %p96 = scmp.eq.s32.totalorder %s9, 0
    %p97 = por %p95, %p96
    %p98 = scmp.ne.s32.totalorder %s87, %s90
    %p99 = scmp.eq.s32.totalorder %s14, 5
    %p100 = por %p98, %p99
    %p101 = scmp.ne.s32.totalorder %s90, %s91
    %p102 = scmp.eq.s32.totalorder %s14, 0
    %p103 = por %p101, %p102
    %p104 = scmp.ne.s32.totalorder %s90, %s91
    %p105 = scmp.eq.s32.totalorder %s15, 5
    %p106 = por %p104, %p105
    %p108 = scmp.ne.s32.totalorder %s91, %s107
    %p109 = scmp.eq.s32.totalorder %s15, 0
    %p110 = por %p108, %p109
    %p111 = scmp.le.s32.totalorder 1, %s9
    %p112 = scmp.lt.s32.totalorder %s9, 7
    %p113 = pnand %p111, %p112
    %p114 = pneg %p113
    // Predicated region
    $region9: #{inverse_block_forward.3} parent=5 // pred_check
      _
    $region10: #{inverse_block_forward.3} parent=5 // pred_check_branch
      %116 = sbr.rel (%p113) target = $region12
    $region11: #{inverse_block_forward.3} parent=5 // pred_region
      %s117 = ssub.s32 %s9, 1
      // Predicated region
      $region13: #{inverse_block_forward.3} parent=11 // pred_check
        %p118 = pneg %p56
      $region14: #{inverse_block_forward.3} parent=11 // pred_check_branch
        %120 = sbr.rel (%p118) target = $region16
      $region15: #{inverse_block_forward.3} parent=11 // pred_region
        _
      $region16: #{inverse_block_forward.3} parent=11 // pred_fallthru
        _
      // Predicated region
      $region17: #{inverse_block_forward.3} parent=11 // pred_check
        %p121 = pneg %p77
      $region18: #{inverse_block_forward.3} parent=11 // pred_check_branch
        %123 = sbr.rel (%p121) target = $region20
      $region19: #{inverse_block_forward.3} parent=11 // pred_region
        _
      $region20: #{inverse_block_forward.3} parent=11 // pred_fallthru
        _
    $region12: #{inverse_block_forward.3} parent=5 // pred_fallthru
      _
    %p124 = scmp.lt.s32.totalorder %s9, 6
    // Predicated region
    $region21: #{inverse_block_forward.3} parent=5 // pred_check
      %p125 = pneg %p124
    $region22: #{inverse_block_forward.3} parent=5 // pred_check_branch
      %127 = sbr.rel (%p125) target = $region24
    $region23: #{inverse_block_forward.3} parent=5 // pred_region
      // Predicated region
      $region25: #{inverse_block_forward.3} parent=23 // pred_check
        %p128 = pneg %p29
      $region26: #{inverse_block_forward.3} parent=23 // pred_check_branch
        %130 = sbr.rel (%p128) target = $region28
      $region27: #{inverse_block_forward.3} parent=23 // pred_region
        %s131 = smul.u32 16, %s9
        %p132 = scmp.lt.s32.totalorder %s131, 95
        %s133 = scalar_select %p132, %s131, 95
        %s134 = smul.addr %s133, 4
        %s135 = scalar_lea.vmem %s0, %s134
        %s136 = smul.u32 16, %s9
      $region28: #{inverse_block_forward.3} parent=23 // pred_fallthru
        _
    $region24: #{inverse_block_forward.3} parent=5 // pred_fallthru
      _
    %p137 = scmp.le.s32.totalorder 1, %s9
    %p138 = scmp.lt.s32.totalorder %s9, 7
    %p139 = pnand %p137, %p138
    %p140 = pneg %p139
    // Predicated region
    $region29: #{inverse_block_forward.3} parent=5 // pred_check
      _
    $region30: #{inverse_block_forward.3} parent=5 // pred_check_branch
      %142 = sbr.rel (%p139) target = $region32
    $region31: #{inverse_block_forward.3} parent=5 // pred_region
      %s143 = ssub.s32 %s9, 1
      %s144 = smul.u32 16, %s14
      %p145 = scmp.lt.s32.totalorder %s144, 95
      %s146 = scalar_select %p145, %s144, 95
      %s147 = smul.addr %s146, 4
      %s148 = scalar_lea.vmem %s0, %s147
      %p149 = pneg %p35
      %p150 = pneg %p32
      %p151 = pneg %p56
      %p152 = pneg %p53
      %p153 = pneg %p77
      %p154 = pneg %p74
      %p155 = pneg %p103
      %p156 = pneg %p100
      %s157 = smul.u32 16, %s14
      %p158 = scmp.lt.s32.totalorder %s157, 95
      %s159 = scalar_select %p158, %s157, 95
      %s160 = smul.addr %s159, 4
      %s161 = scalar_lea.vmem %s3, %s160
      %s162 = smul.u32 16, %s14
      %p163 = scmp.lt.s32.totalorder %s162, 95
      %s164 = scalar_select %p163, %s162, 95
      %s165 = smul.addr %s164, 4
      %s166 = scalar_lea.vmem %s0, %s165
      %s167 = smul.u32 16, %s14
      %s168 = smul.u32 16, %s14
      %p169 = scmp.lt.s32.totalorder %s168, 95
      %s170 = scalar_select %p169, %s168, 95
      %s171 = smul.addr %s170, 4
      %s172 = scalar_lea.vmem %s3, %s171
      %s173 = smul.u32 16, %s14
      %v174 = vld [vmem:[%s166] sm:$0xf]
      %v175 = vld [vmem:[%s166 + $0x4] sm:$0xf]
      %v176 = vld [vmem:[%s166 + $0x8] sm:$0xf]
      %v177 = vld [vmem:[%s166 + $0xc] sm:$0xf]
      %v178 = vld [vmem:[%s166 + $0x10] sm:$0xf]
      %v179 = vld [vmem:[%s166 + $0x14] sm:$0xf]
      %v180 = vld [vmem:[%s166 + $0x18] sm:$0xf]
      %v181 = vld [vmem:[%s166 + $0x1c] sm:$0xf]
      %v182 = vld [vmem:[%s166 + $0x20] sm:$0xf]
      %v183 = vld [vmem:[%s166 + $0x24] sm:$0xf]
      %v184 = vld [vmem:[%s166 + $0x28] sm:$0xf]
      %v185 = vld [vmem:[%s166 + $0x2c] sm:$0xf]
      %v186 = vld [vmem:[%s166 + $0x30] sm:$0xf]
      %v187 = vld [vmem:[%s166 + $0x34] sm:$0xf]
      %v188 = vld [vmem:[%s166 + $0x38] sm:$0xf]
      %v189 = vld [vmem:[%s166 + $0x3c] sm:$0xf]
      %v190 = vunpack.c.l.bf16 %v174
      %v191 = vunpack.c.l.bf16 %v175
      %v192 = vunpack.c.l.bf16 %v176
      %v193 = vunpack.c.l.bf16 %v177
      %v194 = vunpack.c.l.bf16 %v178
      %v195 = vunpack.c.l.bf16 %v179
      %v196 = vunpack.c.l.bf16 %v180
      %v197 = vunpack.c.l.bf16 %v181
      %v198 = vunpack.c.l.bf16 %v182
      %v199 = vunpack.c.l.bf16 %v183
      %v200 = vunpack.c.l.bf16 %v184
      %v201 = vunpack.c.l.bf16 %v185
      %v202 = vunpack.c.l.bf16 %v186
      %v203 = vunpack.c.l.bf16 %v187
      %v204 = vunpack.c.l.bf16 %v188
      %v205 = vunpack.c.l.bf16 %v189
      %v206 = vld [vmem:[%s1] sm:$0x1]
      %v208 = vlaneseq
      %v209 = vshrl.u32 %v208, 7
      %v210 = vsub.s32 0, %v209
      %v211 = vrot.slane %v206, %v210
      %v213 = vmul.f32 %v190, %v211
      %v214 = vmul.f32 %v191, %v211
      %v215 = vmul.f32 %v192, %v211
      %v216 = vmul.f32 %v193, %v211
      %v217 = vmul.f32 %v194, %v211
      %v218 = vmul.f32 %v195, %v211
      %v219 = vmul.f32 %v196, %v211
      %v220 = vmul.f32 %v197, %v211
      %v221 = vmul.f32 %v198, %v211
      %v222 = vmul.f32 %v199, %v211
      %v223 = vmul.f32 %v200, %v211
      %v224 = vmul.f32 %v201, %v211
      %v225 = vmul.f32 %v202, %v211
      %v226 = vmul.f32 %v203, %v211
      %v227 = vmul.f32 %v204, %v211
      %v228 = vmul.f32 %v205, %v211
      %v229 = vld [vmem:[%s2] sm:$0x1]
      %v231 = vlaneseq
      %v232 = vshrl.u32 %v231, 7
      %v233 = vsub.s32 0, %v232
      %v234 = vrot.slane %v229, %v233
      %v236 = vadd.f32 %v213, %v234
      %v237 = vadd.f32 %v214, %v234
      %v238 = vadd.f32 %v215, %v234
      %v239 = vadd.f32 %v216, %v234
      %v240 = vadd.f32 %v217, %v234
      %v241 = vadd.f32 %v218, %v234
      %v242 = vadd.f32 %v219, %v234
      %v243 = vadd.f32 %v220, %v234
      %v244 = vadd.f32 %v221, %v234
      %v245 = vadd.f32 %v222, %v234
      %v246 = vadd.f32 %v223, %v234
      %v247 = vadd.f32 %v224, %v234
      %v248 = vadd.f32 %v225, %v234
      %v249 = vadd.f32 %v226, %v234
      %v250 = vadd.f32 %v227, %v234
      %v251 = vadd.f32 %v228, %v234
      %v252 = vmax.f32 %v236, 0.0
      %v253 = vmax.f32 %v237, 0.0
      %v254 = vmax.f32 %v238, 0.0
      %v255 = vmax.f32 %v239, 0.0
      %v256 = vmax.f32 %v240, 0.0
      %v257 = vmax.f32 %v241, 0.0
      %v258 = vmax.f32 %v242, 0.0
      %v259 = vmax.f32 %v243, 0.0
      %v260 = vmax.f32 %v244, 0.0
      %v261 = vmax.f32 %v245, 0.0
      %v262 = vmax.f32 %v246, 0.0
      %v263 = vmax.f32 %v247, 0.0
      %v264 = vmax.f32 %v248, 0.0
      %v265 = vmax.f32 %v249, 0.0
      %v266 = vmax.f32 %v250, 0.0
      %v267 = vmax.f32 %v251, 0.0
      %v268 = vpack.c.bf16 %v253, %v252
      %v269 = vpack.c.bf16 %v255, %v254
      %v270 = vpack.c.bf16 %v257, %v256
      %v271 = vpack.c.bf16 %v259, %v258
      %v272 = vpack.c.bf16 %v261, %v260
      %v273 = vpack.c.bf16 %v263, %v262
      %v274 = vpack.c.bf16 %v265, %v264
      %v275 = vpack.c.bf16 %v267, %v266
      %v284 = vunpack.c.l.b16 %v268
      %v285 = vunpack.c.h.b16 %v268
      %v286 = vunpack.c.l.b16 %v269
      %v287 = vunpack.c.h.b16 %v269
      %v288 = vunpack.c.l.b16 %v270
      %v289 = vunpack.c.h.b16 %v270
      %v290 = vunpack.c.l.b16 %v271
      %v291 = vunpack.c.h.b16 %v271
      %v292 = vunpack.c.l.b16 %v272
      %v293 = vunpack.c.h.b16 %v272
      %v294 = vunpack.c.l.b16 %v273
      %v295 = vunpack.c.h.b16 %v273
      %v296 = vunpack.c.l.b16 %v274
      %v297 = vunpack.c.h.b16 %v274
      %v298 = vunpack.c.l.b16 %v275
      %v299 = vunpack.c.h.b16 %v275
      %v300 = vpack.c.b16 %v284, %v284
      %v301 = vpack.c.b16 %v285, %v285
      %v302 = vpack.c.b16 %v286, %v286
      %v303 = vpack.c.b16 %v287, %v287
      %v304 = vpack.c.b16 %v288, %v288
      %v305 = vpack.c.b16 %v289, %v289
      %v306 = vpack.c.b16 %v290, %v290
      %v307 = vpack.c.b16 %v291, %v291
      %v308 = vpack.c.b16 %v292, %v292
      %v309 = vpack.c.b16 %v293, %v293
      %v310 = vpack.c.b16 %v294, %v294
      %v311 = vpack.c.b16 %v295, %v295
      %v312 = vpack.c.b16 %v296, %v296
      %v313 = vpack.c.b16 %v297, %v297
      %v314 = vpack.c.b16 %v298, %v298
      %v315 = vpack.c.b16 %v299, %v299
      %332 = vst [vmem:[%s172] sm:$0xf] %v300
      %333 = vst [vmem:[%s172 + $0x4] sm:$0xf] %v301
      %334 = vst [vmem:[%s172 + $0x8] sm:$0xf] %v302
      %335 = vst [vmem:[%s172 + $0xc] sm:$0xf] %v303
      %336 = vst [vmem:[%s172 + $0x10] sm:$0xf] %v304
      %337 = vst [vmem:[%s172 + $0x14] sm:$0xf] %v305
      %338 = vst [vmem:[%s172 + $0x18] sm:$0xf] %v306
      %339 = vst [vmem:[%s172 + $0x1c] sm:$0xf] %v307
      %340 = vst [vmem:[%s172 + $0x20] sm:$0xf] %v308
      %341 = vst [vmem:[%s172 + $0x24] sm:$0xf] %v309
      %342 = vst [vmem:[%s172 + $0x28] sm:$0xf] %v310
      %343 = vst [vmem:[%s172 + $0x2c] sm:$0xf] %v311
      %344 = vst [vmem:[%s172 + $0x30] sm:$0xf] %v312
      %345 = vst [vmem:[%s172 + $0x34] sm:$0xf] %v313
      %346 = vst [vmem:[%s172 + $0x38] sm:$0xf] %v314
      %347 = vst [vmem:[%s172 + $0x3c] sm:$0xf] %v315
      %s348 = smul.u32 16, %s14
      %p349 = scmp.lt.s32.totalorder %s348, 95
      %s350 = scalar_select %p349, %s348, 95
      %s351 = smul.addr %s350, 4
      %s352 = scalar_lea.vmem %s3, %s351
      // Predicated region
      $region33: #{inverse_block_forward.3} parent=31 // pred_check
        %p353 = pneg %p100
      $region34: #{inverse_block_forward.3} parent=31 // pred_check_branch
        %355 = sbr.rel (%p353) target = $region36
      $region35: #{inverse_block_forward.3} parent=31 // pred_region
        %s356 = smul.u32 16, %s14
      $region36: #{inverse_block_forward.3} parent=31 // pred_fallthru
        _
    $region32: #{inverse_block_forward.3} parent=5 // pred_fallthru
      _
    %p357 = scmp.le.s32.totalorder 2, %s9
    // Predicated region
    $region37: #{inverse_block_forward.3} parent=5 // pred_check
      %p358 = pneg %p357
    $region38: #{inverse_block_forward.3} parent=5 // pred_check_branch
      %360 = sbr.rel (%p358) target = $region40
    $region39: #{inverse_block_forward.3} parent=5 // pred_region
      %s361 = ssub.s32 %s9, 2
      // Predicated region
      $region41: #{inverse_block_forward.3} parent=39 // pred_check
        %p362 = pneg %p106
      $region42: #{inverse_block_forward.3} parent=39 // pred_check_branch
        %364 = sbr.rel (%p362) target = $region44
      $region43: #{inverse_block_forward.3} parent=39 // pred_region
        %s365 = smul.u32 16, %s15
        %p366 = scmp.lt.s32.totalorder %s365, 95
        %s367 = scalar_select %p366, %s365, 95
        %s368 = smul.addr %s367, 4
        %s369 = scalar_lea.vmem %s3, %s368
      $region44: #{inverse_block_forward.3} parent=39 // pred_fallthru
        _
    $region40: #{inverse_block_forward.3} parent=5 // pred_fallthru
      _
  $region6: #{inverse_block_forward.3} parent=0 // loop_footer
    %s13 = sadd.s32 1, %s9
  $region7: #{inverse_block_forward.3} parent=0 // loop_footer_branch
    %8 = sbr.rel target = $region3
  $region8: #{inverse_block_forward.3} parent=0 // loop_exit
    _

// kernel: inverse_block_forward.2
$region0: #{inverse_block_forward.2}
  #allocation0 [shape = 'u32[]', space=smem, size = 0x4, offset = 0x4, fixed_abs, tag = 'smem constant byte address 0x4 - core index']
  #allocation1 [shape = 'u32[144,128]{1,0:T(1,128)}', space=vmem, size = 0x12000, scoped, tag = 'internal scratch']
  %s0 = inlined_call_operand.vmem [shape: bf16[768,40], index: 0, kind: input, shape index: {}]
  %s1 = inlined_call_operand.vmem [shape: bf16[40,128], index: 1, kind: input, shape index: {}]
  %s2 = inlined_call_operand.vmem [shape: bf16[768,128], index: 2, kind: output, shape index: {0}]
  %s3 = inlined_call_operand.vmem [shape: f32[6,1,128], index: 3, kind: output, shape index: {1}]
  %s4 = inlined_call_operand.vmem [shape: f32[6,1,128], index: 4, kind: output, shape index: {2}]
  %5 = xla_tuple %s2, %s3, %s4
  %s6 = sld [smem:[#allocation0]]
  $region57: #{inverse_block_forward.2} parent=0
    _
  %s8 = ssub.s32 1, %s6
  %s9 = scalar_select 0, %s8, %s6
  loop: start=0, step=1, limit=8
  $region2: #{inverse_block_forward.2} parent=0 // loop_pre_header
    _
  $region3: #{inverse_block_forward.2} parent=0 // loop_header
    %s11 = sphi 0, %s15
    %p12 = scmp.ge.s32.totalorder %s11, 8
    %s21 = sphi 0, %s23
    %s24 = sphi 0, %s21
    %s25 = sphi 0, %s24
    %s41 = sphi 0, %s25
    %s45 = sphi 0, %s45
    %s47 = sphi 0, %s45
    %s48 = sphi 0, %s47
    %s62 = sphi 0, %s48
    %s68 = sphi 0, %s70
    %s71 = sphi 0, %s68
    %s72 = sphi 0, %s71
    %s88 = sphi 0, %s72
    %s94 = sphi 0, %s96
    %s97 = sphi 0, %s94
    %s98 = sphi 0, %s97
    %s114 = sphi 0, %s98
    %s120 = sphi 0, %s122
    %s123 = sphi 0, %s120
    %s124 = sphi 0, %s123
    %s140 = sphi 0, %s124
  $region4: #{inverse_block_forward.2} parent=0 // loop_header_branch
    %14 = sbr.rel (%p12) target = $region8
  $region5: #{inverse_block_forward.2} parent=0 // loop_body
    %s16 = ssub.s32 %s11, 1
    %s17 = ssub.s32 %s11, 2
    %s18 = sadd.s32 %s11, 1
    %s19 = ssub.s32 %s11, %s18
    %p20 = scmp.eq.s32.totalorder %s19, 0
    %s22 = sadd.s32 %s21, 1
    %s23 = scalar_select %p20, %s21, %s22
    %p26 = pneg %p20
    %p27 = scmp.eq.s32.totalorder %s11, 5
    %p28 = por %p26, %p27
    %p29 = scmp.ne.s32.totalorder %s21, %s24
    %p30 = scmp.eq.s32.totalorder %s11, 0
    %p31 = por %p29, %p30
    %p32 = scmp.ne.s32.totalorder %s21, %s24
    %p33 = scmp.eq.s32.totalorder %s16, 5
    %p34 = por %p32, %p33
    %p35 = scmp.ne.s32.totalorder %s24, %s25
    %p36 = scmp.eq.s32.totalorder %s16, 0
    %p37 = por %p35, %p36
    %p38 = scmp.ne.s32.totalorder %s24, %s25
    %p39 = scmp.eq.s32.totalorder %s17, 5
    %p40 = por %p38, %p39
    %p42 = scmp.ne.s32.totalorder %s25, %s41
    %p43 = scmp.eq.s32.totalorder %s17, 0
    %p44 = por %p42, %p43
    %s46 = sadd.s32 %s45, 1
    %p49 = scmp.eq.s32.totalorder %s11, 5
    %p50 = scmp.ne.s32.totalorder %s45, %s47
    %p51 = scmp.eq.s32.totalorder %s11, 0
    %p52 = por %p50, %p51
    %p53 = scmp.ne.s32.totalorder %s45, %s47
    %p54 = scmp.eq.s32.totalorder %s16, 5
    %p55 = por %p53, %p54
    %p56 = scmp.ne.s32.totalorder %s47, %s48
    %p57 = scmp.eq.s32.totalorder %s16, 0
    %p58 = por %p56, %p57
    %p59 = scmp.ne.s32.totalorder %s47, %s48
    %p60 = scmp.eq.s32.totalorder %s17, 5
    %p61 = por %p59, %p60
    %p63 = scmp.ne.s32.totalorder %s48, %s62
    %p64 = scmp.eq.s32.totalorder %s17, 0
    %p65 = por %p63, %p64
    %s66 = ssub.s32 %s11, %s18
    %p67 = scmp.eq.s32.totalorder %s66, 0
    %s69 = sadd.s32 %s68, 1
    %s70 = scalar_select %p67, %s68, %s69
    %p73 = pneg %p67
    %p74 = scmp.eq.s32.totalorder %s11, 5
    %p75 = por %p73, %p74
    %p76 = scmp.ne.s32.totalorder %s68, %s71
    %p77 = scmp.eq.s32.totalorder %s11, 0
    %p78 = por %p76, %p77
    %p79 = scmp.ne.s32.totalorder %s68, %s71
    %p80 = scmp.eq.s32.totalorder %s16, 5
    %p81 = por %p79, %p80
    %p82 = scmp.ne.s32.totalorder %s71, %s72
    %p83 = scmp.eq.s32.totalorder %s16, 0
    %p84 = por %p82, %p83
    %p85 = scmp.ne.s32.totalorder %s71, %s72
    %p86 = scmp.eq.s32.totalorder %s17, 5
    %p87 = por %p85, %p86
    %p89 = scmp.ne.s32.totalorder %s72, %s88
    %p90 = scmp.eq.s32.totalorder %s17, 0
    %p91 = por %p89, %p90
    %s92 = ssub.s32 %s11, %s18
    %p93 = scmp.eq.s32.totalorder %s92, 0
    %s95 = sadd.s32 %s94, 1
    %s96 = scalar_select %p93, %s94, %s95
    %p99 = pneg %p93
    %p100 = scmp.eq.s32.totalorder %s11, 5
    %p101 = por %p99, %p100
    %p102 = scmp.ne.s32.totalorder %s94, %s97
    %p103 = scmp.eq.s32.totalorder %s11, 0
    %p104 = por %p102, %p103
    %p105 = scmp.ne.s32.totalorder %s94, %s97
    %p106 = scmp.eq.s32.totalorder %s16, 5
    %p107 = por %p105, %p106
    %p108 = scmp.ne.s32.totalorder %s97, %s98
    %p109 = scmp.eq.s32.totalorder %s16, 0
    %p110 = por %p108, %p109
    %p111 = scmp.ne.s32.totalorder %s97, %s98
    %p112 = scmp.eq.s32.totalorder %s17, 5
    %p113 = por %p111, %p112
    %p115 = scmp.ne.s32.totalorder %s98, %s114
    %p116 = scmp.eq.s32.totalorder %s17, 0
    %p117 = por %p115, %p116
    %s118 = ssub.s32 %s11, %s18
    %p119 = scmp.eq.s32.totalorder %s118, 0
    %s121 = sadd.s32 %s120, 1
    %s122 = scalar_select %p119, %s120, %s121
    %p125 = pneg %p119
    %p126 = scmp.eq.s32.totalorder %s11, 5
    %p127 = por %p125, %p126
    %p128 = scmp.ne.s32.totalorder %s120, %s123
    %p129 = scmp.eq.s32.totalorder %s11, 0
    %p130 = por %p128, %p129
    %p131 = scmp.ne.s32.totalorder %s120, %s123
    %p132 = scmp.eq.s32.totalorder %s16, 5
    %p133 = por %p131, %p132
    %p134 = scmp.ne.s32.totalorder %s123, %s124
    %p135 = scmp.eq.s32.totalorder %s16, 0
    %p136 = por %p134, %p135
    %p137 = scmp.ne.s32.totalorder %s123, %s124
    %p138 = scmp.eq.s32.totalorder %s17, 5
    %p139 = por %p137, %p138
    %p141 = scmp.ne.s32.totalorder %s124, %s140
    %p142 = scmp.eq.s32.totalorder %s17, 0
    %p143 = por %p141, %p142
    %p144 = scmp.le.s32.totalorder 1, %s11
    %p145 = scmp.lt.s32.totalorder %s11, 7
    %p146 = pnand %p144, %p145
    %p147 = pneg %p146
    // Predicated region
    $region9: #{inverse_block_forward.2} parent=5 // pred_check
      _
    $region10: #{inverse_block_forward.2} parent=5 // pred_check_branch
      %149 = sbr.rel (%p146) target = $region12
    $region11: #{inverse_block_forward.2} parent=5 // pred_region
      %s150 = ssub.s32 %s11, 1
      // Predicated region
      $region13: #{inverse_block_forward.2} parent=11 // pred_check
        %p151 = pneg %p58
      $region14: #{inverse_block_forward.2} parent=11 // pred_check_branch
        %153 = sbr.rel (%p151) target = $region16
      $region15: #{inverse_block_forward.2} parent=11 // pred_region
        _
      $region16: #{inverse_block_forward.2} parent=11 // pred_fallthru
        _
    $region12: #{inverse_block_forward.2} parent=5 // pred_fallthru
      _
    %p154 = scmp.lt.s32.totalorder %s11, 6
    // Predicated region
    $region17: #{inverse_block_forward.2} parent=5 // pred_check
      %p155 = pneg %p154
    $region18: #{inverse_block_forward.2} parent=5 // pred_check_branch
      %157 = sbr.rel (%p155) target = $region20
    $region19: #{inverse_block_forward.2} parent=5 // pred_region
      // Predicated region
      $region21: #{inverse_block_forward.2} parent=19 // pred_check
        %p158 = pneg %p31
      $region22: #{inverse_block_forward.2} parent=19 // pred_check_branch
        %160 = sbr.rel (%p158) target = $region24
      $region23: #{inverse_block_forward.2} parent=19 // pred_region
        %s161 = smul.u32 16, %s11
        %p162 = scmp.lt.s32.totalorder %s161, 95
        %s163 = scalar_select %p162, %s161, 95
        %s164 = smul.addr %s163, 4
        %s165 = scalar_lea.vmem %s0, %s164
        %s166 = smul.u32 16, %s11
      $region24: #{inverse_block_forward.2} parent=19 // pred_fallthru
        _
    $region20: #{inverse_block_forward.2} parent=5 // pred_fallthru
      _
    %p167 = scmp.le.s32.totalorder 1, %s11
    %p168 = scmp.lt.s32.totalorder %s11, 7
    %p169 = pnand %p167, %p168
    %p170 = pneg %p169
    // Predicated region
    $region25: #{inverse_block_forward.2} parent=5 // pred_check
      _
    $region26: #{inverse_block_forward.2} parent=5 // pred_check_branch
      %172 = sbr.rel (%p169) target = $region28
    $region27: #{inverse_block_forward.2} parent=5 // pred_region
      %s173 = ssub.s32 %s11, 1
      %s174 = smul.u32 16, %s16
      %p175 = scmp.lt.s32.totalorder %s174, 95
      %s176 = scalar_select %p175, %s174, 95
      %s177 = smul.addr %s176, 4
      %s178 = scalar_lea.vmem %s0, %s177
      %p179 = pneg %p37
      %p180 = pneg %p34
      %p181 = pneg %p58
      %p182 = pneg %p55
      %p183 = pneg %p84
      %p184 = pneg %p81
      %s185 = smul.u32 16, %s16
      %p186 = scmp.lt.s32.totalorder %s185, 95
      %s187 = scalar_select %p186, %s185, 95
      %s188 = smul.addr %s187, 4
      %s189 = scalar_lea.vmem %s2, %s188
      %p190 = pneg %p110
      %p191 = pneg %p107
      %p192 = scmp.lt.s32.totalorder %s16, 5
      %s193 = scalar_select %p192, %s16, 5
      %s194 = scalar_lea.vmem %s3, %s193
      %p195 = pneg %p136
      %p196 = pneg %p133
      %p197 = scmp.lt.s32.totalorder %s16, 5
      %s198 = scalar_select %p197, %s16, 5
      %s199 = scalar_lea.vmem %s4, %s198
      %s200 = smul.u32 16, %s16
      %p201 = scmp.lt.s32.totalorder %s200, 95
      %s202 = scalar_select %p201, %s200, 95
      %s203 = smul.addr %s202, 4
      %s204 = scalar_lea.vmem %s0, %s203
      %s205 = smul.u32 16, %s16
      %s206 = smul.u32 16, %s16
      %p207 = scmp.lt.s32.totalorder %s206, 95
      %s208 = scalar_select %p207, %s206, 95
      %s209 = smul.addr %s208, 4
      %s210 = scalar_lea.vmem %s2, %s209
      %s211 = smul.u32 16, %s16
      %p212 = scmp.lt.s32.totalorder %s16, 5
      %s213 = scalar_select %p212, %s16, 5
      %s214 = scalar_lea.vmem %s3, %s213
      %p215 = scmp.lt.s32.totalorder %s16, 5
      %s216 = scalar_select %p215, %s16, 5
      %s217 = scalar_lea.vmem %s4, %s216
      %v219 = vld [vmem:[%s204] sm:$0xf]
      %v220 = vld [vmem:[%s204 + $0x4] sm:$0xf]
      %v221 = vld [vmem:[%s204 + $0x8] sm:$0xf]
      %v222 = vld [vmem:[%s204 + $0xc] sm:$0xf]
      %v223 = vld [vmem:[%s204 + $0x10] sm:$0xf]
      %v224 = vld [vmem:[%s204 + $0x14] sm:$0xf]
      %v225 = vld [vmem:[%s204 + $0x18] sm:$0xf]
      %v226 = vld [vmem:[%s204 + $0x1c] sm:$0xf]
      %v227 = vld [vmem:[%s204 + $0x20] sm:$0xf]
      %v228 = vld [vmem:[%s204 + $0x24] sm:$0xf]
      %v229 = vld [vmem:[%s204 + $0x28] sm:$0xf]
      %v230 = vld [vmem:[%s204 + $0x2c] sm:$0xf]
      %v231 = vld [vmem:[%s204 + $0x30] sm:$0xf]
      %v232 = vld [vmem:[%s204 + $0x34] sm:$0xf]
      %v233 = vld [vmem:[%s204 + $0x38] sm:$0xf]
      %v234 = vld [vmem:[%s204 + $0x3c] sm:$0xf]
      %v235 = vld [vmem:[%s1] sm:$0xf]
      %v236 = vld [vmem:[%s1 + $0x4] sm:$0xf]
      %v237 = vld [vmem:[%s1 + $0x8] sm:$0xf]
      %v238 = vld [vmem:[%s1 + $0xc] sm:$0xf]
      %v239 = vld [vmem:[%s1 + $0x10] sm:$0xf]
      %v256 = vunpack.c.l.b16 %v219
      %v257 = vunpack.c.l.b16 %v220
      %v258 = vunpack.c.l.b16 %v221
      %v259 = vunpack.c.l.b16 %v222
      %v260 = vunpack.c.l.b16 %v223
      %v261 = vunpack.c.l.b16 %v224
      %v262 = vunpack.c.l.b16 %v225
      %v263 = vunpack.c.l.b16 %v226
      %v264 = vunpack.c.l.b16 %v227
      %v265 = vunpack.c.l.b16 %v228
      %v266 = vunpack.c.l.b16 %v229
      %v267 = vunpack.c.l.b16 %v230
      %v268 = vunpack.c.l.b16 %v231
      %v269 = vunpack.c.l.b16 %v232
      %v270 = vunpack.c.l.b16 %v233
      %v271 = vunpack.c.l.b16 %v234
      %v272 = vpack.c.b16 %v257, %v256
      %v273 = vpack.c.b16 %v259, %v258
      %v274 = vpack.c.b16 %v261, %v260
      %v275 = vpack.c.b16 %v263, %v262
      %v276 = vpack.c.b16 %v265, %v264
      %v277 = vpack.c.b16 %v267, %v266
      %v278 = vpack.c.b16 %v269, %v268
      %v279 = vpack.c.b16 %v271, %v270
      %v285 = vunpack.c.l.b16 %v235
      %v286 = vunpack.c.l.b16 %v236
      %v287 = vunpack.c.l.b16 %v237
      %v288 = vunpack.c.l.b16 %v238
      %v289 = vunpack.c.l.b16 %v239
      %v290 = vpack.c.b16 %v286, %v285
      %v291 = vpack.c.b16 %v288, %v287
      %v292 = vpack.c.b16 %v289, %v289
      %vm295 = vcmask 326656
      %v297 = vsel %vm295, %v272, 0
      %v300 = vsel %vm295, %v273, 0
      %v303 = vsel %vm295, %v274, 0
      %v306 = vsel %vm295, %v275, 0
      %v309 = vsel %vm295, %v276, 0
      %v312 = vsel %vm295, %v277, 0
      %v315 = vsel %vm295, %v278, 0
      %v318 = vsel %vm295, %v279, 0
      %vm320 = vcmask 1043456
      %v322 = vsel %vm320, %v292, 0
      %324 = vmatprep.subr.bf16.mxu0 0
      %325 = vmatpush1.bf16.msra.mxu0 %v290
      %326 = vmatprep.subr.bf16.mxu0 0
      %327 = vmatpush1.bf16.msra.mxu0 %v291
      %328 = vmatprep.subr.bf16.mxu0 0
      %329 = vmatpush1.bf16.msra.mxu0 %v322
      %330 = vmatprep.subr.bf16.mxu0 0
      %331 = vmatpush1.bf16.msra.mxu0 0
      %332 = vmatprep.subr.bf16.mxu0 0
      %333 = vmatpush1.bf16.msra.mxu0 0
      %334 = vmatprep.subr.bf16.mxu0 0
      %335 = vmatpush1.bf16.msra.mxu0 0
      %336 = vmatprep.subr.bf16.mxu0 0
      %337 = vmatpush1.bf16.msra.mxu0 0
      %338 = vmatprep.subr.bf16.mxu0 0
      %339 = vmatpush1.bf16.msra.mxu0 0
      %340 = vmatprep.subr.bf16.mxu0 0
      %341 = vmatpush1.bf16.msra.mxu0 0
      %342 = vmatprep.subr.bf16.mxu0 0
      %343 = vmatpush1.bf16.msra.mxu0 0
      %344 = vmatprep.subr.bf16.mxu0 0
      %345 = vmatpush1.bf16.msra.mxu0 0
      %346 = vmatprep.subr.bf16.mxu0 0
      %347 = vmatpush1.bf16.msra.mxu0 0
      %348 = vmatprep.subr.bf16.mxu0 0
      %349 = vmatpush1.bf16.msra.mxu0 0
      %350 = vmatprep.subr.bf16.mxu0 0
      %351 = vmatpush1.bf16.msra.mxu0 0
      %352 = vmatprep.subr.bf16.mxu0 0
      %353 = vmatpush1.bf16.msra.mxu0 0
      %354 = vmatprep.subr.bf16.mxu0 0
      %355 = vmatpush1.bf16.msra.mxu0 0
      %356 = vmatprep.mubr.bf16.mxu0 0
      %357 = vmatmul.mubr.bf16.gmra.mrb[0].mxu0 %v297
      %v358 = vpop.f32.mrb[0].mxu0
      %v359 = vadd.f32 0.0, %v358
      %v360 = vpop.f32.mrb[0].mxu0
      %v361 = vpop.f32.mrb[0].mxu0
      %v362 = vadd.f32 0.0, %v361
      %v363 = vpop.f32.mrb[0].mxu0
      %364 = vmatprep.mubr.bf16.mxu0 0
      %365 = vmatmul.mubr.bf16.gmra.mrb[0].mxu0 %v300
      %v366 = vpop.f32.mrb[0].mxu0
      %v367 = vadd.f32 0.0, %v366
      %v368 = vpop.f32.mrb[0].mxu0
      %v369 = vpop.f32.mrb[0].mxu0
      %v370 = vadd.f32 0.0, %v369
      %v371 = vpop.f32.mrb[0].mxu0
      %372 = vmatprep.mubr.bf16.mxu0 0
      %373 = vmatmul.mubr.bf16.gmra.mrb[0].mxu0 %v303
      %v374 = vpop.f32.mrb[0].mxu0
      %v375 = vadd.f32 0.0, %v374
      %v376 = vpop.f32.mrb[0].mxu0
      %v377 = vpop.f32.mrb[0].mxu0
      %v378 = vadd.f32 0.0, %v377
      %v379 = vpop.f32.mrb[0].mxu0
      %380 = vmatprep.mubr.bf16.mxu0 0
      %381 = vmatmul.mubr.bf16.gmra.mrb[0].mxu0 %v306
      %v382 = vpop.f32.mrb[0].mxu0
      %v383 = vadd.f32 0.0, %v382
      %v384 = vpop.f32.mrb[0].mxu0
      %v385 = vpop.f32.mrb[0].mxu0
      %v386 = vadd.f32 0.0, %v385
      %v387 = vpop.f32.mrb[0].mxu0
      %388 = vmatprep.mubr.bf16.mxu0 0
      %389 = vmatmul.mubr.bf16.gmra.mrb[0].mxu0 %v309
      %v390 = vpop.f32.mrb[0].mxu0
      %v391 = vadd.f32 0.0, %v390
      %v392 = vpop.f32.mrb[0].mxu0
      %v393 = vpop.f32.mrb[0].mxu0
      %v394 = vadd.f32 0.0, %v393
      %v395 = vpop.f32.mrb[0].mxu0
      %396 = vmatprep.mubr.bf16.mxu0 0
      %397 = vmatmul.mubr.bf16.gmra.mrb[0].mxu0 %v312
      %v398 = vpop.f32.mrb[0].mxu0
      %v399 = vadd.f32 0.0, %v398
      %v400 = vpop.f32.mrb[0].mxu0
      %v401 = vpop.f32.mrb[0].mxu0
      %v402 = vadd.f32 0.0, %v401
      %v403 = vpop.f32.mrb[0].mxu0
      %404 = vmatprep.mubr.bf16.mxu0 0
      %405 = vmatmul.mubr.bf16.gmra.mrb[0].mxu0 %v315
      %v406 = vpop.f32.mrb[0].mxu0
      %v407 = vadd.f32 0.0, %v406
      %v408 = vpop.f32.mrb[0].mxu0
      %v409 = vpop.f32.mrb[0].mxu0
      %v410 = vadd.f32 0.0, %v409
      %v411 = vpop.f32.mrb[0].mxu0
      %412 = vmatprep.mubr.bf16.mxu0 0
      %413 = vmatmul.mubr.bf16.gmra.mrb[0].mxu0 %v318
      %v414 = vpop.f32.mrb[0].mxu0
      %v415 = vadd.f32 0.0, %v414
      %v416 = vpop.f32.mrb[0].mxu0
      %v417 = vpop.f32.mrb[0].mxu0
      %v418 = vadd.f32 0.0, %v417
      %v419 = vpop.f32.mrb[0].mxu0
      %420 = vdwg.mxu0
      %v421 = vpack.c.bf16 %v362, %v359
      %v422 = vpack.c.bf16 %v370, %v367
      %v423 = vpack.c.bf16 %v378, %v375
      %v424 = vpack.c.bf16 %v386, %v383
      %v425 = vpack.c.bf16 %v394, %v391
      %v426 = vpack.c.bf16 %v402, %v399
      %v427 = vpack.c.bf16 %v410, %v407
      %v428 = vpack.c.bf16 %v418, %v415
      %v437 = vunpack.c.l.b16 %v421
      %v438 = vunpack.c.h.b16 %v421
      %v439 = vunpack.c.l.b16 %v422
      %v440 = vunpack.c.h.b16 %v422
      %v441 = vunpack.c.l.b16 %v423
      %v442 = vunpack.c.h.b16 %v423
      %v443 = vunpack.c.l.b16 %v424
      %v444 = vunpack.c.h.b16 %v424
      %v445 = vunpack.c.l.b16 %v425
      %v446 = vunpack.c.h.b16 %v425
      %v447 = vunpack.c.l.b16 %v426
      %v448 = vunpack.c.h.b16 %v426
      %v449 = vunpack.c.l.b16 %v427
      %v450 = vunpack.c.h.b16 %v427
      %v451 = vunpack.c.l.b16 %v428
      %v452 = vunpack.c.h.b16 %v428
      %v453 = vpack.c.b16 %v437, %v437
      %v454 = vpack.c.b16 %v438, %v438
      %v455 = vpack.c.b16 %v439, %v439
      %v456 = vpack.c.b16 %v440, %v440
      %v457 = vpack.c.b16 %v441, %v441
      %v458 = vpack.c.b16 %v442, %v442
      %v459 = vpack.c.b16 %v443, %v443
      %v460 = vpack.c.b16 %v444, %v444
      %v461 = vpack.c.b16 %v445, %v445
      %v462 = vpack.c.b16 %v446, %v446
      %v463 = vpack.c.b16 %v447, %v447
      %v464 = vpack.c.b16 %v448, %v448
      %v465 = vpack.c.b16 %v449, %v449
      %v466 = vpack.c.b16 %v450, %v450
      %v467 = vpack.c.b16 %v451, %v451
      %v468 = vpack.c.b16 %v452, %v452
      %485 = vst [vmem:[%s210] sm:$0xf] %v453
      %486 = vst [vmem:[%s210 + $0x4] sm:$0xf] %v454
      %487 = vst [vmem:[%s210 + $0x8] sm:$0xf] %v455
      %488 = vst [vmem:[%s210 + $0xc] sm:$0xf] %v456
      %489 = vst [vmem:[%s210 + $0x10] sm:$0xf] %v457
      %490 = vst [vmem:[%s210 + $0x14] sm:$0xf] %v458
      %491 = vst [vmem:[%s210 + $0x18] sm:$0xf] %v459
      %492 = vst [vmem:[%s210 + $0x1c] sm:$0xf] %v460
      %493 = vst [vmem:[%s210 + $0x20] sm:$0xf] %v461
      %494 = vst [vmem:[%s210 + $0x24] sm:$0xf] %v462
      %495 = vst [vmem:[%s210 + $0x28] sm:$0xf] %v463
      %496 = vst [vmem:[%s210 + $0x2c] sm:$0xf] %v464
      %497 = vst [vmem:[%s210 + $0x30] sm:$0xf] %v465
      %498 = vst [vmem:[%s210 + $0x34] sm:$0xf] %v466
      %499 = vst [vmem:[%s210 + $0x38] sm:$0xf] %v467
      %500 = vst [vmem:[%s210 + $0x3c] sm:$0xf] %v468
      %s501 = smul.u32 %s16, 128
      %s502 = ssub.s32 648, %s501
      %p503 = scmp.lt.s32.totalorder %s502, 128
      %s504 = scalar_select %p503, %s502, 128
      %p505 = scmp.gt.s32.totalorder %s504, 1
      %s506 = scalar_select %p505, %s504, 1
      %s507 = scvt.s32.f32 %s506
      %v508 = vadd.f32 %v359, %v362
      %v509 = vadd.f32 %v508, %v367
      %v510 = vadd.f32 %v509, %v370
      %v511 = vadd.f32 %v510, %v375
      %v512 = vadd.f32 %v511, %v378
      %v513 = vadd.f32 %v512, %v383
      %v514 = vadd.f32 %v513, %v386
      %v515 = vadd.f32 %v514, %v391
      %v516 = vadd.f32 %v515, %v394
      %v517 = vadd.f32 %v516, %v399
      %v518 = vadd.f32 %v517, %v402
      %v519 = vadd.f32 %v518, %v407
      %v520 = vadd.f32 %v519, %v410
      %v521 = vadd.f32 %v520, %v415
      %v522 = vadd.f32 %v521, %v418
      %v523 = vrot.slane %v522, 4
      %v524 = vadd.f32 %v522, %v523
      %v525 = vrot.slane %v524, 2
      %v526 = vadd.f32 %v524, %v525
      %v527 = vrot.slane %v526, 1
      %v528 = vadd.f32 %v526, %v527
      %v529 = vstv %s507
      %v530 = vrcp.pop %v529
      %v531 = vmul.f32 %v528, %v530
      %v532 = vlaneseq
      %v533 = vshrl.u32 %v532, 7
      %v534 = vadd.s32 %v533, 8
      %v535 = vadd.s32 %v533, 16
      %v536 = vadd.s32 %v533, 24
      %v537 = vadd.s32 %v533, 32
      %v538 = vadd.s32 %v533, 40
      %v539 = vadd.s32 %v533, 48
      %v540 = vadd.s32 %v533, 56
      %v541 = vadd.s32 %v533, 64
      %v542 = vadd.s32 %v533, 72
      %v543 = vadd.s32 %v533, 80
      %v544 = vadd.s32 %v533, 88
      %v545 = vadd.s32 %v533, 96
      %v546 = vadd.s32 %v533, 104
      %v547 = vadd.s32 %v533, 112
      %v548 = vadd.s32 %v533, 120
      %v549 = vstv %s501
      %v550 = vadd.s32 %v533, %v549
      %v551 = vadd.s32 %v534, %v549
      %v552 = vadd.s32 %v535, %v549
      %v553 = vadd.s32 %v536, %v549
      %v554 = vadd.s32 %v537, %v549
      %v555 = vadd.s32 %v538, %v549
      %v556 = vadd.s32 %v539, %v549
      %v557 = vadd.s32 %v540, %v549
      %v558 = vadd.s32 %v541, %v549
      %v559 = vadd.s32 %v542, %v549
      %v560 = vadd.s32 %v543, %v549
      %v561 = vadd.s32 %v544, %v549
      %v562 = vadd.s32 %v545, %v549
      %v563 = vadd.s32 %v546, %v549
      %v564 = vadd.s32 %v547, %v549
      %v565 = vadd.s32 %v548, %v549
      %vm566 = vcmp.lt.s32.totalorder %v550, 648
      %vm567 = vcmp.lt.s32.totalorder %v551, 648
      %vm568 = vcmp.lt.s32.totalorder %v552, 648
      %vm569 = vcmp.lt.s32.totalorder %v553, 648
      %vm570 = vcmp.lt.s32.totalorder %v554, 648
      %vm571 = vcmp.lt.s32.totalorder %v555, 648
      %vm572 = vcmp.lt.s32.totalorder %v556, 648
      %vm573 = vcmp.lt.s32.totalorder %v557, 648
      %vm574 = vcmp.lt.s32.totalorder %v558, 648
      %vm575 = vcmp.lt.s32.totalorder %v559, 648
      %vm576 = vcmp.lt.s32.totalorder %v560, 648
      %vm577 = vcmp.lt.s32.totalorder %v561, 648
      %vm578 = vcmp.lt.s32.totalorder %v562, 648
      %vm579 = vcmp.lt.s32.totalorder %v563, 648
      %vm580 = vcmp.lt.s32.totalorder %v564, 648
      %vm581 = vcmp.lt.s32.totalorder %v565, 648
      %v582 = vsub.f32 %v359, %v531
      %v583 = vsub.f32 %v362, %v531
      %v584 = vsub.f32 %v367, %v531
      %v585 = vsub.f32 %v370, %v531
      %v586 = vsub.f32 %v375, %v531
      %v587 = vsub.f32 %v378, %v531
      %v588 = vsub.f32 %v383, %v531
      %v589 = vsub.f32 %v386, %v531
      %v590 = vsub.f32 %v391, %v531
      %v591 = vsub.f32 %v394, %v531
      %v592 = vsub.f32 %v399, %v531
      %v593 = vsub.f32 %v402, %v531
      %v594 = vsub.f32 %v407, %v531
      %v595 = vsub.f32 %v410, %v531
      %v596 = vsub.f32 %v415, %v531
      %v597 = vsub.f32 %v418, %v531
      %v598 = vsel %vm566, %v582, 0.0
      %v599 = vsel %vm567, %v583, 0.0
      %v600 = vsel %vm568, %v584, 0.0
      %v601 = vsel %vm569, %v585, 0.0
      %v602 = vsel %vm570, %v586, 0.0
      %v603 = vsel %vm571, %v587, 0.0
      %v604 = vsel %vm572, %v588, 0.0
      %v605 = vsel %vm573, %v589, 0.0
      %v606 = vsel %vm574, %v590, 0.0
      %v607 = vsel %vm575, %v591, 0.0
      %v608 = vsel %vm576, %v592, 0.0
      %v609 = vsel %vm577, %v593, 0.0
      %v610 = vsel %vm578, %v594, 0.0
      %v611 = vsel %vm579, %v595, 0.0
      %v612 = vsel %vm580, %v596, 0.0
      %v613 = vsel %vm581, %v597, 0.0
      %v614 = vmul.f32 %v598, %v598
      %v615 = vmul.f32 %v599, %v599
      %v616 = vmul.f32 %v600, %v600
      %v617 = vmul.f32 %v601, %v601
      %v618 = vmul.f32 %v602, %v602
      %v619 = vmul.f32 %v603, %v603
      %v620 = vmul.f32 %v604, %v604
      %v621 = vmul.f32 %v605, %v605
      %v622 = vmul.f32 %v606, %v606
      %v623 = vmul.f32 %v607, %v607
      %v624 = vmul.f32 %v608, %v608
      %v625 = vmul.f32 %v609, %v609
      %v626 = vmul.f32 %v610, %v610
      %v627 = vmul.f32 %v611, %v611
      %v628 = vmul.f32 %v612, %v612
      %v629 = vmul.f32 %v613, %v613
      %v630 = vadd.f32 %v614, %v615
      %v631 = vadd.f32 %v630, %v616
      %v632 = vadd.f32 %v631, %v617
      %v633 = vadd.f32 %v632, %v618
      %v634 = vadd.f32 %v633, %v619
      %v635 = vadd.f32 %v634, %v620
      %v636 = vadd.f32 %v635, %v621
      %v637 = vadd.f32 %v636, %v622
      %v638 = vadd.f32 %v637, %v623
      %v639 = vadd.f32 %v638, %v624
      %v640 = vadd.f32 %v639, %v625
      %v641 = vadd.f32 %v640, %v626
      %v642 = vadd.f32 %v641, %v627
      %v643 = vadd.f32 %v642, %v628
      %v644 = vadd.f32 %v643, %v629
      %v645 = vrot.slane %v644, 4
      %v646 = vadd.f32 %v644, %v645
      %v647 = vrot.slane %v646, 2
      %v648 = vadd.f32 %v646, %v647
      %v649 = vrot.slane %v648, 1
      %v650 = vadd.f32 %v648, %v649
      %651 = vst [vmem:[%s214] sm:$0x1] %v528
      %652 = vst [vmem:[%s217] sm:$0x1] %v650
      %s653 = smul.u32 16, %s16
      %p654 = scmp.lt.s32.totalorder %s653, 95
      %s655 = scalar_select %p654, %s653, 95
      %s656 = smul.addr %s655, 4
      %s657 = scalar_lea.vmem %s2, %s656
      %p658 = scmp.lt.s32.totalorder %s16, 5
      %s659 = scalar_select %p658, %s16, 5
      %s660 = scalar_lea.vmem %s3, %s659
      %p661 = scmp.lt.s32.totalorder %s16, 5
      %s662 = scalar_select %p661, %s16, 5
      %s663 = scalar_lea.vmem %s4, %s662
      // Predicated region
      $region29: #{inverse_block_forward.2} parent=27 // pred_check
        %p664 = pneg %p81
      $region30: #{inverse_block_forward.2} parent=27 // pred_check_branch
        %666 = sbr.rel (%p664) target = $region32
      $region31: #{inverse_block_forward.2} parent=27 // pred_region
        %s667 = smul.u32 16, %s16
      $region32: #{inverse_block_forward.2} parent=27 // pred_fallthru
        _
      // Predicated region
      $region33: #{inverse_block_forward.2} parent=27 // pred_check
        %p668 = pneg %p107
      $region34: #{inverse_block_forward.2} parent=27 // pred_check_branch
        %670 = sbr.rel (%p668) target = $region36
      $region35: #{inverse_block_forward.2} parent=27 // pred_region
        _
      $region36: #{inverse_block_forward.2} parent=27 // pred_fallthru
        _
      // Predicated region
      $region37: #{inverse_block_forward.2} parent=27 // pred_check
        %p671 = pneg %p133
      $region38: #{inverse_block_forward.2} parent=27 // pred_check_branch
        %673 = sbr.rel (%p671) target = $region40
      $region39: #{inverse_block_forward.2} parent=27 // pred_region
        _
      $region40: #{inverse_block_forward.2} parent=27 // pred_fallthru
        _
    $region28: #{inverse_block_forward.2} parent=5 // pred_fallthru
      _
    %p674 = scmp.le.s32.totalorder 2, %s11
    // Predicated region
    $region41: #{inverse_block_forward.2} parent=5 // pred_check
      %p675 = pneg %p674
    $region42: #{inverse_block_forward.2} parent=5 // pred_check_branch
      %677 = sbr.rel (%p675) target = $region44
    $region43: #{inverse_block_forward.2} parent=5 // pred_region
      %s678 = ssub.s32 %s11, 2
      // Predicated region
      $region45: #{inverse_block_forward.2} parent=43 // pred_check
        %p679 = pneg %p87
      $region46: #{inverse_block_forward.2} parent=43 // pred_check_branch
        %681 = sbr.rel (%p679) target = $region48
      $region47: #{inverse_block_forward.2} parent=43 // pred_region
        %s682 = smul.u32 16, %s17
        %p683 = scmp.lt.s32.totalorder %s682, 95
        %s684 = scalar_select %p683, %s682, 95
        %s685 = smul.addr %s684, 4
        %s686 = scalar_lea.vmem %s2, %s685
      $region48: #{inverse_block_forward.2} parent=43 // pred_fallthru
        _
      // Predicated region
      $region49: #{inverse_block_forward.2} parent=43 // pred_check
        %p687 = pneg %p113
      $region50: #{inverse_block_forward.2} parent=43 // pred_check_branch
        %689 = sbr.rel (%p687) target = $region52
      $region51: #{inverse_block_forward.2} parent=43 // pred_region
        %p690 = scmp.lt.s32.totalorder %s17, 5
        %s691 = scalar_select %p690, %s17, 5
        %s692 = scalar_lea.vmem %s3, %s691
      $region52: #{inverse_block_forward.2} parent=43 // pred_fallthru
        _
      // Predicated region
      $region53: #{inverse_block_forward.2} parent=43 // pred_check
        %p693 = pneg %p139
      $region54: #{inverse_block_forward.2} parent=43 // pred_check_branch
        %695 = sbr.rel (%p693) target = $region56
      $region55: #{inverse_block_forward.2} parent=43 // pred_region
        %p696 = scmp.lt.s32.totalorder %s17, 5
        %s697 = scalar_select %p696, %s17, 5
        %s698 = scalar_lea.vmem %s4, %s697
      $region56: #{inverse_block_forward.2} parent=43 // pred_fallthru
        _
    $region44: #{inverse_block_forward.2} parent=5 // pred_fallthru
      _
  $region6: #{inverse_block_forward.2} parent=0 // loop_footer
    %s15 = sadd.s32 1, %s11
  $region7: #{inverse_block_forward.2} parent=0 // loop_footer_branch
    %10 = sbr.rel target = $region3
  $region8: #{inverse_block_forward.2} parent=0 // loop_exit
    _

</llo_original>
